<compile_context>
chip_gen: v7x
topology: tpu7x:2x2x1
jax: 0.10.0
libtpu: 0.0.40
codegen_flags: <defaults>
</compile_context>

<pallas_src>
import functools

import jax
import jax.numpy as jnp
from jax import lax
from jax.experimental import pallas as pl
from jax.experimental.pallas import tpu as pltpu

_LANES = 128
_SUB_ROWS = 512  # inner accumulation chunk: 512*128*4 B = 256 KiB per operand


def _num_tensorcores():
    """2 TensorCores per chip on v7x; 1 on v5e/v6e. Best-effort detection."""
    try:
        kind = jax.devices()[0].device_kind.lower()
    except Exception:
        return 1
    if "v7" in kind or "tpu7" in kind:
        return 2
    return 1


def _bce_sum_kernel(p_ref, t_ref, out_ref, acc_ref, *,
                    kernel_total, tile_rows, sub_rows, steps_per_core,
                    needs_mask):
    c = pl.program_id(0)           # TensorCore split ("parallel")
    k = pl.program_id(1)           # streaming/reduction axis ("arbitrary")

    @pl.when(k == 0)
    def _():
        acc_ref[...] = jnp.zeros_like(acc_ref)

    block_elems = tile_rows * _LANES
    sub_elems = sub_rows * _LANES
    n_sub = tile_rows // sub_rows
    # Elements of the kernel's stream still ahead of this block's start.
    # <= 0 for duplicated (clamped) out-of-range blocks -> fully masked.
    remaining = kernel_total - (c * steps_per_core + k) * block_elems

    def chunk_loss(i):
        r0 = pl.multiple_of(i * sub_rows, 8)
        p = p_ref[pl.ds(r0, sub_rows), :].astype(jnp.float32)
        t = t_ref[pl.ds(r0, sub_rows), :].astype(jnp.float32)
        # PyTorch BCELoss: -(t*log(p) + (1-t)*log(1-p)), log clamped at -100,
        # rewritten as -(t*(log_p - log_1p) + log_1p) (one fewer mul/sub).
        log_p = jnp.maximum(jnp.log(p), jnp.float32(-100.0))
        log_1p = jnp.maximum(jnp.log(1.0 - p), jnp.float32(-100.0))
        return -(t * (log_p - log_1p) + log_1p)

    def accumulate(loss):
        # Lane/sublane-preserving accumulation into the fixed (8,128) scratch:
        # pure VPU adds, no cross-lane traffic until the tiny wrapper-side sum.
        acc_ref[...] += loss.reshape(sub_rows // 8, 8, _LANES).sum(axis=0)

    def full_body(i, carry):
        accumulate(chunk_loss(i))
        return carry

    if needs_mask:
        # Mask work is gated off all full tiles (statically skipped entirely
        # when the stream divides evenly).
        @pl.when(remaining >= block_elems)
        def _():
            lax.fori_loop(0, n_sub, full_body, 0)

        @pl.when(remaining < block_elems)
        def _():
            def masked_body(i, carry):
                loss = chunk_loss(i)
                row_ids = lax.broadcasted_iota(jnp.int32, (sub_rows, _LANES), 0)
                lane_ids = lax.broadcasted_iota(jnp.int32, (sub_rows, _LANES), 1)
                idx = i * sub_elems + row_ids * _LANES + lane_ids
                # Keep the select form (NOT multiply-by-mask): the padded
                # region may hold garbage p outside (0,1) whose loss is NaN.
                accumulate(jnp.where(idx < remaining, loss, jnp.float32(0.0)))
                return carry
            lax.fori_loop(0, n_sub, masked_body, 0)
    else:
        lax.fori_loop(0, n_sub, full_body, 0)

    @pl.when(k == pl.num_programs(1) - 1)
    def _():
        # Per-core lane-dense partial; final cross-lane reduce + mean is a
        # trivial wrapper-side sum over (num_cores*8, 128) elements.
        out_ref[...] = acc_ref[...]


def bce_loss(pred, target, *, tile_rows=8192, num_cores=None):
    assert pred.shape == target.shape
    total = int(pred.size)
    if total == 0:
        return jnp.float32(jnp.nan)  # matches torch mean over empty

    p = pred.reshape(-1)
    t = target.reshape(-1)

    rows = total // _LANES
    main = rows * _LANES

    # <128-element ragged tail: plain JAX (avoids materializing padded copies
    # of both full streams in HBM in front of a memory-bound kernel).
    tail_sum = jnp.float32(0.0)
    if main != total:
        pt = p[main:].astype(jnp.float32)
        tt = t[main:].astype(jnp.float32)
        lp = jnp.maximum(jnp.log(pt), -100.0)
        l1p = jnp.maximum(jnp.log(1.0 - pt), -100.0)
        tail_sum = jnp.sum(-(tt * (lp - l1p) + l1p))

    if rows == 0:
        return tail_sum / jnp.float32(total)

    p2 = p[:main].reshape(rows, _LANES)
    t2 = t[:main].reshape(rows, _LANES)

    # Tile height: as large as possible, multiple of 8 sublanes, clamped for
    # small inputs.
    tr = max(min(tile_rows, ((rows + 7) // 8) * 8), 8)
    blocks = pl.cdiv(rows, tr)

    if num_cores is None:
        num_cores = _num_tensorcores()
    num_cores = max(1, min(int(num_cores), blocks))
    steps = pl.cdiv(blocks, num_cores)

    # Inner accumulation chunk (bounds VMEM intermediates / vreg live ranges).
    sub = _SUB_ROWS if (tr >= _SUB_ROWS and tr % _SUB_ROWS == 0) else tr

    # Mask needed only if the last block is partial or trailing blocks are
    # duplicated (clamped) to fill the per-core step count.
    needs_mask = (rows % tr != 0) or (num_cores * steps != blocks)

    if num_cores * steps == blocks:
        in_idx = lambda c, k: (c * steps + k, 0)
    else:
        # Clamp duplicated trailing blocks onto the last real block; the
        # in-kernel mask zeroes their contribution.
        in_idx = lambda c, k: (jnp.minimum(c * steps + k, blocks - 1), 0)

    kernel = functools.partial(
        _bce_sum_kernel,
        kernel_total=main,
        tile_rows=tr,
        sub_rows=sub,
        steps_per_core=steps,
        needs_mask=needs_mask,
    )

    itemsize = jnp.dtype(p2.dtype).itemsize
    # 2 inputs x 2 pipeline buffers x tile, plus headroom for temporaries.
    vmem_limit = min(2 * 2 * tr * _LANES * itemsize + (16 << 20), 48 << 20)

    partials = pl.pallas_call(
        kernel,
        out_shape=jax.ShapeDtypeStruct((num_cores * 8, _LANES), jnp.float32),
        grid_spec=pltpu.PrefetchScalarGridSpec(
            num_scalar_prefetch=0,
            grid=(num_cores, steps),
            in_specs=[
                pl.BlockSpec((tr, _LANES), in_idx),
                pl.BlockSpec((tr, _LANES), in_idx),
            ],
            out_specs=pl.BlockSpec((8, _LANES), lambda c, k: (c, 0)),
            scratch_shapes=[pltpu.VMEM((8, _LANES), jnp.float32)],
        ),
        compiler_params=pltpu.CompilerParams(
            dimension_semantics=("parallel", "arbitrary"),
            vmem_limit_bytes=vmem_limit,
        ),
    )(p2, t2)

    return (jnp.sum(partials) + tail_sum) / jnp.float32(total)


def bce_loss_ref(pred, target):
    p = pred.reshape(-1).astype(jnp.float32)
    t = target.reshape(-1).astype(jnp.float32)
    log_p = jnp.maximum(jnp.log(p), -100.0)
    log_1p = jnp.maximum(jnp.log(1.0 - p), -100.0)
    return jnp.mean(-(t * log_p + (1.0 - t) * log_1p))


if __name__ == "__main__":
    key = jax.random.PRNGKey(0)

    # 1) Primary: NCHW prediction / binary mask pair (evenly divisible stream).
    k1, k2, k3, k4, k5, k6 = jax.random.split(key, 6)
    pred = jax.nn.sigmoid(jax.random.normal(k1, (2, 4, 16, 16), jnp.float32))
    target = (jax.random.uniform(k2, (2, 4, 16, 16)) > 0.5).astype(jnp.float32)
    loss = bce_loss(pred, target)
    jax.block_until_ready(loss)
    ref = bce_loss_ref(pred, target)
    assert jnp.allclose(loss, ref, rtol=1e-4, atol=1e-5), (loss, ref)

    # 2) Partial last tile (exercises the in-kernel masked path).
    pred2 = jax.nn.sigmoid(jax.random.normal(k3, (3, 4, 16, 16), jnp.float32))
    target2 = (jax.random.uniform(k4, (3, 4, 16, 16)) > 0.5).astype(jnp.float32)
    loss2 = bce_loss(pred2, target2, tile_rows=16)
    jax.block_until_ready(loss2)
    ref2 = bce_loss_ref(pred2, target2)
    assert jnp.allclose(loss2, ref2, rtol=1e-4, atol=1e-5), (loss2, ref2)

    # 3) Non-multiple-of-128 element count (exercises the JAX tail path).
    pred3 = jax.nn.sigmoid(jax.random.normal(k5, (2, 537), jnp.float32))
    target3 = (jax.random.uniform(k6, (2, 537)) > 0.5).astype(jnp.float32)
    loss3 = bce_loss(pred3, target3)
    jax.block_until_ready(loss3)
    ref3 = bce_loss_ref(pred3, target3)
    assert jnp.allclose(loss3, ref3, rtol=1e-4, atol=1e-5), (loss3, ref3)

    print("KERNEL_OK")
</pallas_src>

<mosaic_0001>
module attributes {stable_mosaic.version = 11 : i64} {
  func.func @_bce_sum_kernel(%arg0: i32, %arg1: i32, %arg2: memref<16x128xf32, #tpu.memory_space<vmem>>, %arg3: memref<16x128xf32, #tpu.memory_space<vmem>>, %arg4: memref<8x128xf32, #tpu.memory_space<vmem>>, %arg5: memref<8x128xf32, #tpu.memory_space<vmem>>) attributes {dimension_semantics = [#tpu.dimension_semantics<parallel>, #tpu.dimension_semantics<arbitrary>], iteration_bounds = array<i64: 1, 1>, scalar_prefetch = 0 : i64, scratch_operands = 1 : i64, tpu.core_type = #tpu.core_type<tc>, window_params = [{transform_indices = @transform_0, window_bounds = array<i64: 16, 128>}, {transform_indices = @transform_1, window_bounds = array<i64: 16, 128>}, {transform_indices = @transform_2, window_bounds = array<i64: 8, 128>}]} {
    %c0_i32 = arith.constant 0 : i32
    %0 = arith.cmpi eq, %arg1, %c0_i32 : i32
    %1 = arith.extui %0 : i1 to i32
    %c0_i32_0 = arith.constant 0 : i32
    %2 = arith.cmpi ne, %1, %c0_i32_0 : i32
    scf.if %2 {
      %cst_13 = arith.constant 0.000000e+00 : f32
      %30 = vector.broadcast %cst_13 : f32 to vector<8x128xf32>
      %c0_14 = arith.constant 0 : index
      %c0_15 = arith.constant 0 : index
      %31 = vector.load %arg5[%c0_14, %c0_15] : memref<8x128xf32, #tpu.memory_space<vmem>>, vector<8x128xf32>
      tpu.vector_store %arg5[%c0_14, %c0_15], %30 {strides = array<i32>} : memref<8x128xf32, #tpu.memory_space<vmem>>, vector<8x128xf32>,
    } else {
    }
    %c0_i32_1 = arith.constant 0 : i32
    %c16_i32 = arith.constant 16 : i32
    %3 = arith.muli %c0_i32_1, %c16_i32 : i32
    %4 = tpu.assume_multiple %3, 8 : i32
    %5 = arith.index_cast %4 : i32 to index
    %c0 = arith.constant 0 : index
    %6 = vector.load %arg2[%5, %c0] : memref<16x128xf32, #tpu.memory_space<vmem>>, vector<16x128xf32>
    %7 = arith.index_cast %4 : i32 to index
    %c0_2 = arith.constant 0 : index
    %8 = vector.load %arg3[%7, %c0_2] : memref<16x128xf32, #tpu.memory_space<vmem>>, vector<16x128xf32>
    %9 = math.log %6 : vector<16x128xf32>
    %cst = arith.constant -1.000000e+02 : f32
    %10 = vector.broadcast %cst : f32 to vector<16x128xf32>
    %11 = arith.maximumf %9, %10 : vector<16x128xf32>
    %cst_3 = arith.constant 1.000000e+00 : f32
    %12 = vector.broadcast %cst_3 : f32 to vector<16x128xf32>
    %13 = arith.subf %12, %6 : vector<16x128xf32>
    %14 = math.log %13 : vector<16x128xf32>
    %cst_4 = arith.constant -1.000000e+02 : f32
    %15 = vector.broadcast %cst_4 : f32 to vector<16x128xf32>
    %16 = arith.maximumf %14, %15 : vector<16x128xf32>
    %17 = arith.subf %11, %16 : vector<16x128xf32>
    %18 = arith.mulf %8, %17 : vector<16x128xf32>
    %19 = arith.addf %18, %16 : vector<16x128xf32>
    %cst_5 = arith.constant 0.000000e+00 : f32
    %20 = vector.broadcast %cst_5 : f32 to vector<16x128xf32>
    %21 = arith.subf %20, %19 : vector<16x128xf32>
    %c0_6 = arith.constant 0 : index
    %c0_7 = arith.constant 0 : index
    %22 = vector.load %arg5[%c0_6, %c0_7] : memref<8x128xf32, #tpu.memory_space<vmem>>, vector<8x128xf32>
    %23 = vector.shape_cast %21 : vector<16x128xf32> to vector<2x8x128xf32>
    %cst_8 = arith.constant dense<0.000000e+00> : vector<8x128xf32>
    %24 = vector.multi_reduction <add>, %23, %cst_8 [0] : vector<2x8x128xf32> to vector<8x128xf32>
    %25 = arith.addf %22, %24 : vector<8x128xf32>
    %c0_9 = arith.constant 0 : index
    %c0_10 = arith.constant 0 : index
    %26 = vector.load %arg5[%c0_9, %c0_10] : memref<8x128xf32, #tpu.memory_space<vmem>>, vector<8x128xf32>
    tpu.vector_store %arg5[%c0_9, %c0_10], %25 {strides = array<i32>} : memref<8x128xf32, #tpu.memory_space<vmem>>, vector<8x128xf32>,
    %c1_i32 = arith.constant 1 : i32
    %c0_i32_11 = arith.constant 0 : i32
    %27 = arith.cmpi eq, %arg1, %c0_i32_11 : i32
    %28 = arith.extui %27 : i1 to i32
    %c0_i32_12 = arith.constant 0 : i32
    %29 = arith.cmpi ne, %28, %c0_i32_12 : i32
    scf.if %29 {
      %c0_13 = arith.constant 0 : index
      %c0_14 = arith.constant 0 : index
      %30 = vector.load %arg5[%c0_13, %c0_14] : memref<8x128xf32, #tpu.memory_space<vmem>>, vector<8x128xf32>
      %c0_15 = arith.constant 0 : index
      %c0_16 = arith.constant 0 : index
      %31 = vector.load %arg4[%c0_15, %c0_16] : memref<8x128xf32, #tpu.memory_space<vmem>>, vector<8x128xf32>
      tpu.vector_store %arg4[%c0_15, %c0_16], %30 {strides = array<i32>} : memref<8x128xf32, #tpu.memory_space<vmem>>, vector<8x128xf32>,
    } else {
    }
    return
  }
  func.func @transform_0(%arg0: i32, %arg1: i32) -> (i32, i32) {
    %c1_i32 = arith.constant 1 : i32
    %0 = arith.muli %arg0, %c1_i32 : i32
    %1 = arith.addi %0, %arg1 : i32
    %c0_i32 = arith.constant 0 : i32
    %c0_i32_0 = arith.constant 0 : i32
    return %1, %c0_i32 : i32, i32
  }
  func.func @transform_1(%arg0: i32, %arg1: i32) -> (i32, i32) {
    %c1_i32 = arith.constant 1 : i32
    %0 = arith.muli %arg0, %c1_i32 : i32
    %1 = arith.addi %0, %arg1 : i32
    %c0_i32 = arith.constant 0 : i32
    %c0_i32_0 = arith.constant 0 : i32
    return %1, %c0_i32 : i32, i32
  }
  func.func @transform_2(%arg0: i32, %arg1: i32) -> (i32, i32) {
    %c0_i32 = arith.constant 0 : i32
    %c0_i32_0 = arith.constant 0 : i32
    return %arg0, %c0_i32 : i32, i32
  }
}

</mosaic_0001>

<llo_original>
// kernel: tpu_custom_call.1
$region0: #{tpu_custom_call.1}
  #allocation0 [shape = 'u32[]', space=smem, size = 0x4, offset = 0x4, fixed_abs, tag = 'smem constant byte address 0x4 - core index']
  #allocation1 [shape = 'u32[144,128]{1,0:T(1,128)}', space=vmem, size = 0x12000, scoped, tag = 'internal scratch']
  #allocation2 [shape = 'f32[8,128]{1,0:T(8,128)}', space=vmem, size = 0x1000, scoped, tag = 'scratch operand']
  %s0 = inlined_call_operand.hbm [shape: f32[16,128], index: 0, kind: input, shape index: {}]
  %s1 = inlined_call_operand.hbm [shape: f32[16,128], index: 1, kind: input, shape index: {}]
  %s2 = inlined_call_operand.hbm [shape: f32[8,128], index: 2, kind: output, shape index: {}]
  %s3 = sld [smem:[#allocation0]]
  $region34: #{tpu_custom_call.1} parent=0
    _
  %s5 = ssub.s32 1, %s3
  %s6 = scalar_select 0, %s5, %s3
  $region1: #{tpu_custom_call.1} parent=0
    #allocation3 [shape = 'u8[8192]{0}', space=vmem, size = 0x2000, scoped, tag = 'input window, operand 0, single buffered']
    #allocation4 [shape = 's32[1]{0}', space=sflag, size = 0x4, scoped, tag = 'scoped memory for tpu_custom_call.1']
    #allocation5 [shape = 's32[1]{0}', space=sflag, size = 0x4, scoped, tag = 'scoped memory for tpu_custom_call.1']
    #allocation6 [shape = 'u8[8192]{0}', space=vmem, size = 0x2000, scoped, tag = 'input window, operand 1, single buffered']
    #allocation7 [shape = 's32[1]{0}', space=sflag, size = 0x4, scoped, tag = 'scoped memory for tpu_custom_call.1']
    #allocation8 [shape = 'u8[4096]{0}', space=vmem, size = 0x1000, scoped, tag = 'output window, operand 0, single buffered']
    %7 = vsyncpa [#allocation4], 0
    %8 = vsyncpa [#allocation7], 0
    %9 = vsyncpa [#allocation5], 0
    // Predicated region
    $region2: #{tpu_custom_call.1} parent=1 // pred_check
      _
    $region3: #{tpu_custom_call.1} parent=1 // pred_check_branch
      %11 = sbr.rel (0) target = $region5
    $region4: #{tpu_custom_call.1} parent=1 // pred_region
      %s12 = sadd.s32 0, 0
      %s13 = smul.u32 2, %s12
      %s15 = ssub.s32 256, 256
      %16 = vsyncadd [#allocation4], %s15
      %s17 = smul.addr %s13, 128
      %s18 = scalar_lea.hbm %s0, %s17
      %s19 = sshll.u32 [#allocation3], 4
      %s20 = int_to_ptr.vmem [resolvable:$true] %s19
      %25 = dma.hbm_to_vmem [thread:$0]  %s18, 256, %s20, [#allocation4], 128, 128, 8
    $region5: #{tpu_custom_call.1} parent=1 // pred_fallthru
      _
    // Predicated region
    $region6: #{tpu_custom_call.1} parent=1 // pred_check
      _
    $region7: #{tpu_custom_call.1} parent=1 // pred_check_branch
      %27 = sbr.rel (0) target = $region9
    $region8: #{tpu_custom_call.1} parent=1 // pred_region
      %s28 = sadd.s32 0, 0
      %s29 = smul.u32 2, %s28
      %s31 = ssub.s32 256, 256
      %32 = vsyncadd [#allocation7], %s31
      %s33 = smul.addr %s29, 128
      %s34 = scalar_lea.hbm %s1, %s33
      %s35 = sshll.u32 [#allocation6], 4
      %s36 = int_to_ptr.vmem [resolvable:$true] %s35
      %41 = dma.hbm_to_vmem [thread:$0]  %s34, 256, %s36, [#allocation7], 128, 128, 8
    $region9: #{tpu_custom_call.1} parent=1 // pred_fallthru
      _
    // Predicated region
    $region10: #{tpu_custom_call.1} parent=1 // pred_check
      _
    $region11: #{tpu_custom_call.1} parent=1 // pred_check_branch
      %43 = sbr.rel (0) target = $region13
    $region12: #{tpu_custom_call.1} parent=1 // pred_region
      %44 = dma.done [#allocation4], 256
    $region13: #{tpu_custom_call.1} parent=1 // pred_fallthru
      _
    // Predicated region
    $region14: #{tpu_custom_call.1} parent=1 // pred_check
      _
    $region15: #{tpu_custom_call.1} parent=1 // pred_check_branch
      %46 = sbr.rel (0) target = $region17
    $region16: #{tpu_custom_call.1} parent=1 // pred_region
      %47 = dma.done [#allocation7], 256
    $region17: #{tpu_custom_call.1} parent=1 // pred_fallthru
      _
    %s48 = sadd.s32 0, 0
    %s49 = smul.u32 2, %s48
    %s50 = sadd.s32 0, 0
    %s51 = smul.u32 2, %s50
    %p52 = scmp.eq.s32.totalorder 0, 0
    // Predicated region
    $region18: #{tpu_custom_call.1} parent=1 // pred_check
      %p53 = pneg %p52
    $region19: #{tpu_custom_call.1} parent=1 // pred_check_branch
      %55 = sbr.rel (%p53) target = $region21
    $region20: #{tpu_custom_call.1} parent=1 // pred_region
      %56 = vst [vmem:[#allocation2] sm:$0xff] 0.0
    $region21: #{tpu_custom_call.1} parent=1 // pred_fallthru
      _
    %v57 = vld [vmem:[#allocation3] sm:$0xff]
    %v58 = vld [vmem:[#allocation3 + $0x8] sm:$0xff]
    %v59 = vld [vmem:[#allocation6] sm:$0xff]
    %v60 = vld [vmem:[#allocation6 + $0x8] sm:$0xff]
    %v61 = vlog2.pop %v57
    %v62 = vmul.f32 %v61, 0.6931472
    %v63 = vlog2.pop %v58
    %v64 = vmul.f32 %v63, 0.6931472
    %v65 = vmax.f32 %v62, -100.0
    %v66 = vmax.f32 %v64, -100.0
    %v67 = vsub.f32 1.0, %v57
    %v68 = vsub.f32 1.0, %v58
    %v69 = vlog2.pop %v67
    %v70 = vmul.f32 %v69, 0.6931472
    %v71 = vlog2.pop %v68
    %v72 = vmul.f32 %v71, 0.6931472
    %v73 = vmax.f32 %v70, -100.0
    %v74 = vmax.f32 %v72, -100.0
    %v75 = vsub.f32 %v65, %v73
    %v76 = vsub.f32 %v66, %v74
    %v77 = vmul.f32 %v59, %v75
    %v78 = vmul.f32 %v60, %v76
    %v79 = vadd.f32 %v77, %v73
    %v80 = vadd.f32 %v78, %v74
    %v81 = vsub.f32 0.0, %v79
    %v82 = vsub.f32 0.0, %v80
    %v83 = vld [vmem:[#allocation2] sm:$0xff]
    %v84 = vadd.f32 %v81, %v82
    %v85 = vadd.f32 %v83, %v84
    %86 = vst [vmem:[#allocation2] sm:$0xff] %v85
    // Predicated region
    $region22: #{tpu_custom_call.1} parent=1 // pred_check
      %p87 = pneg %p52
    $region23: #{tpu_custom_call.1} parent=1 // pred_check_branch
      %89 = sbr.rel (%p87) target = $region25
    $region24: #{tpu_custom_call.1} parent=1 // pred_region
      %v90 = vld [vmem:[#allocation2] sm:$0xff]
      %91 = vst [vmem:[#allocation8] sm:$0xff] %v90
    $region25: #{tpu_custom_call.1} parent=1 // pred_fallthru
      _
    // Predicated region
    $region26: #{tpu_custom_call.1} parent=1 // pred_check
      _
    $region27: #{tpu_custom_call.1} parent=1 // pred_check_branch
      %93 = sbr.rel (0) target = $region29
    $region28: #{tpu_custom_call.1} parent=1 // pred_region
      %s95 = ssub.s32 128, 128
      %96 = vsyncadd [#allocation5], %s95
      %s98 = sshll.u32 [#allocation8], 4
      %s99 = int_to_ptr.vmem [resolvable:$true] %s98
      %101 = dma.vmem_to_hbm [thread:$0]  %s99, 128, %s2, [#allocation5]
    $region29: #{tpu_custom_call.1} parent=1 // pred_fallthru
      _
    // Predicated region
    $region30: #{tpu_custom_call.1} parent=1 // pred_check
      _
    $region31: #{tpu_custom_call.1} parent=1 // pred_check_branch
      %103 = sbr.rel (0) target = $region33
    $region32: #{tpu_custom_call.1} parent=1 // pred_region
      %104 = dma.done [#allocation5], 128
    $region33: #{tpu_custom_call.1} parent=1 // pred_fallthru
      _
    %105 = vsyncpa [#allocation4], 1
    %106 = vsyncpa [#allocation7], 1
    %107 = vsyncpa [#allocation5], 1

</llo_original>
